<compile_context>
chip_gen: v6e
topology: v6e:2x2x1
jax: 0.10.0
libtpu: 0.0.40
codegen_flags: <defaults>
</compile_context>

<pallas_src>
import functools

import jax
import jax.numpy as jnp
from jax.experimental import pallas as pl
from jax.experimental.pallas import tpu as pltpu


# --------------------------------------------------------------------------- #
# Kernels
# --------------------------------------------------------------------------- #
def _linear_nobias_kernel(x_ref, w_ref, o_ref):
    # x_ref: (TB, D), w_ref: (D, TC), o_ref: (TB, TC)
    acc = jnp.dot(x_ref[...], w_ref[...], preferred_element_type=jnp.float32)
    o_ref[...] = acc.astype(o_ref.dtype)


def _linear_bias_kernel(x_ref, w_ref, b_ref, o_ref):
    # x_ref: (TB, D), w_ref: (D, TC), b_ref: (1, TC) f32, o_ref: (TB, TC)
    acc = jnp.dot(x_ref[...], w_ref[...], preferred_element_type=jnp.float32)
    o_ref[...] = (acc + b_ref[...]).astype(o_ref.dtype)


# --------------------------------------------------------------------------- #
# Tiling / VMEM budgeting
# --------------------------------------------------------------------------- #
def _round_up(x, m):
    return ((x + m - 1) // m) * m


@functools.lru_cache(maxsize=None)
def _vmem_limit_bytes():
    """Generation-aware usable-VMEM estimate (per TensorCore)."""
    try:
        cap = pltpu.get_tpu_info().vmem_capacity_bytes
    except Exception:
        cap = 64 * 1024 * 1024  # conservative fallback: v7x per-TC physical VMEM
    # Leave headroom for Mosaic-internal scratch; never ask for ~all of 128 MiB.
    return min(int(cap * 0.85), 112 * 1024 * 1024)


def _choose_tiles(batch, d, c_pad, in_bytes, out_bytes, budget):
    """Pick (TB, TC) tiles whose pipelined footprint fits `budget` bytes.

    Footprint = 2x weight tile + 2x bias row (Pallas double-buffers every
    input spec) + 2x x tile + 2x output tile + the f32 accumulator temp.
    """
    # Class tile: keep the whole padded class dim resident if its
    # double-buffered weight slab fits in ~half the budget; otherwise shrink
    # in multiples of 256 (full MXU width on v6e/v7x).
    tc = min(c_pad, 4096)
    while tc > 256 and 2 * d * tc * in_bytes > budget // 2:
        tc = _round_up(tc // 2, 256)
    tc = max(256, min(tc, c_pad))

    fixed = 2 * d * tc * in_bytes + 2 * tc * 4  # weight + f32 bias row, 2-buffered

    # Batch tile: biggest that fits; large TB amortizes ~0.35 us/grid-step
    # overhead (start at 2048 now that bf16 halves residency).
    tb = 2048
    while tb > 8:
        need = fixed + tb * (2 * d * in_bytes + 2 * tc * out_bytes + tc * 4)
        if need <= budget:
            break
        tb //= 2
    tb = max(8, tb)
    tb = min(tb, _round_up(batch, 8))  # never bigger than the (8-rounded) batch
    return tb, tc


# --------------------------------------------------------------------------- #
# Wrapper
# --------------------------------------------------------------------------- #
@functools.partial(jax.jit, static_argnames=("compute_dtype",))
def weight_norm_classifier_forward(x, weight, bias=None, *, compute_dtype=None):
    """Pallas implementation of F.linear(x, weight, bias).

    compute_dtype: dtype fed to the MXU (e.g. jnp.bfloat16 for native-rate
    matmuls). Default None keeps x.dtype (no silent precision change).
    Accumulation is always f32; output keeps x.dtype.
    """
    B, D = x.shape
    C, D2 = weight.shape
    assert D == D2, (D, D2)

    out_dtype = x.dtype
    cdt = jnp.dtype(compute_dtype) if compute_dtype is not None else jnp.dtype(x.dtype)
    in_bytes = cdt.itemsize
    out_bytes = jnp.dtype(out_dtype).itemsize

    # Lane-dense output, padded to the 256-wide MXU N dimension (v6e/v7x).
    c_pad = _round_up(C, 256)

    vmem_limit = _vmem_limit_bytes()
    tb, tc = _choose_tiles(B, D, c_pad, in_bytes, out_bytes, int(vmem_limit * 0.9))

    # One-time wrapper-side cast + transpose: weight consumed as (D, C_pad) so
    # the hot loop is a canonical MXU matmul with no per-tile XLU transpose.
    # Zero-padded class columns produce zero logits and are sliced off below.
    x_c = x.astype(cdt)
    w_t = jnp.pad(weight.astype(cdt).T, ((0, 0), (0, c_pad - C)))

    nb = pl.cdiv(B, tb)        # no explicit batch pad: last tile rows are masked
    nc = pl.cdiv(c_pad, tc)

    x_spec = pl.BlockSpec((tb, D), lambda i, j: (i, 0))
    w_spec = pl.BlockSpec((D, tc), lambda i, j: (0, j))
    o_spec = pl.BlockSpec((tb, tc), lambda i, j: (i, j))

    cp = pltpu.CompilerParams(
        dimension_semantics=("parallel", "parallel"),   # megacore sharding
        vmem_limit_bytes=vmem_limit,
    )

    if bias is None:
        out = pl.pallas_call(
            _linear_nobias_kernel,
            out_shape=jax.ShapeDtypeStruct((B, c_pad), out_dtype),
            grid_spec=pl.GridSpec(
                grid=(nb, nc),
                in_specs=[x_spec, w_spec],
                out_specs=o_spec,
            ),
            compiler_params=cp,
        )(x_c, w_t)
    else:
        b_row = jnp.pad(bias.astype(jnp.float32), (0, c_pad - C)).reshape(1, c_pad)
        b_spec = pl.BlockSpec((1, tc), lambda i, j: (0, j))
        out = pl.pallas_call(
            _linear_bias_kernel,
            out_shape=jax.ShapeDtypeStruct((B, c_pad), out_dtype),
            grid_spec=pl.GridSpec(
                grid=(nb, nc),
                in_specs=[x_spec, w_spec, b_spec],
                out_specs=o_spec,
            ),
            compiler_params=cp,
        )(x_c, w_t, b_row)

    # Drop the padded class columns.
    return out[:, :C]


# --------------------------------------------------------------------------- #
# Smoke test
# --------------------------------------------------------------------------- #
if __name__ == "__main__":
    key = jax.random.PRNGKey(0)
    k_w, k_x, k_b = jax.random.split(key, 3)

    # Small shapes consistent with the module.
    in_dim, n_classes, batch = 32, 4, 8

    # kaiming_normal_ stand-in (fan_in mode): N(0, 2/in_dim).
    weight = jax.random.normal(k_w, (n_classes, in_dim), jnp.float32) * jnp.sqrt(
        2.0 / in_dim
    )
    x = jax.random.normal(k_x, (batch, in_dim), jnp.float32)

    # bias=False path (module default), exact f32 compute.
    out = jax.block_until_ready(weight_norm_classifier_forward(x, weight))
    ref = x @ weight.T
    assert out.shape == (batch, n_classes)
    assert jnp.allclose(out, ref, atol=1e-5, rtol=1e-5), (out, ref)

    # bias=True path (module zero-inits the bias; use a nonzero one to exercise the add).
    bias = jax.random.normal(k_b, (n_classes,), jnp.float32)
    out_b = jax.block_until_ready(weight_norm_classifier_forward(x, weight, bias))
    ref_b = ref + bias
    assert out_b.shape == (batch, n_classes)
    assert jnp.allclose(out_b, ref_b, atol=1e-5, rtol=1e-5), (out_b, ref_b)

    # bf16 MXU feed (perf path): f32 accumulate, looser tolerance.
    out_bf = jax.block_until_ready(
        weight_norm_classifier_forward(x, weight, bias, compute_dtype=jnp.bfloat16)
    )
    assert out_bf.shape == (batch, n_classes)
    assert jnp.allclose(out_bf, ref_b, atol=5e-2, rtol=5e-2), (out_bf, ref_b)

    print("KERNEL_OK")
</pallas_src>

<mosaic_0001>
module attributes {stable_mosaic.version = 11 : i64} {
  func.func @_linear_nobias_kernel(%arg0: i32, %arg1: i32, %arg2: memref<8x32xf32, #tpu.memory_space<vmem>>, %arg3: memref<32x256xf32, #tpu.memory_space<vmem>>, %arg4: memref<8x256xf32, #tpu.memory_space<vmem>>) attributes {dimension_semantics = [#tpu.dimension_semantics<parallel>, #tpu.dimension_semantics<parallel>], iteration_bounds = array<i64: 1, 1>, scalar_prefetch = 0 : i64, scratch_operands = 0 : i64, tpu.core_type = #tpu.core_type<tc>, window_params = [{transform_indices = @transform_0, window_bounds = array<i64: 8, 32>}, {transform_indices = @transform_1, window_bounds = array<i64: 32, 256>}, {transform_indices = @transform_2, window_bounds = array<i64: 8, 256>}]} {
    %c0 = arith.constant 0 : index
    %c0_0 = arith.constant 0 : index
    %0 = vector.load %arg2[%c0, %c0_0] : memref<8x32xf32, #tpu.memory_space<vmem>>, vector<8x32xf32>
    %c0_1 = arith.constant 0 : index
    %c0_2 = arith.constant 0 : index
    %1 = vector.load %arg3[%c0_1, %c0_2] : memref<32x256xf32, #tpu.memory_space<vmem>>, vector<32x256xf32>
    %cst = arith.constant dense<0.000000e+00> : vector<8x256xf32>
    %2 = tpu.matmul %0, %1, %cst {dimension_numbers = #tpu.dot_dimension_numbers<[1], [0], [0], [1], [0, 0, 1, 1], [], []>} : vector<8x32xf32>, vector<32x256xf32>, vector<8x256xf32> -> vector<8x256xf32>
    %c0_3 = arith.constant 0 : index
    %c0_4 = arith.constant 0 : index
    %3 = vector.load %arg4[%c0_3, %c0_4] : memref<8x256xf32, #tpu.memory_space<vmem>>, vector<8x256xf32>
    tpu.vector_store %arg4[%c0_3, %c0_4], %2 {strides = array<i32>} : memref<8x256xf32, #tpu.memory_space<vmem>>, vector<8x256xf32>,
    return
  }
  func.func @transform_0(%arg0: i32, %arg1: i32) -> (i32, i32) {
    %c0_i32 = arith.constant 0 : i32
    %c0_i32_0 = arith.constant 0 : i32
    return %arg0, %c0_i32 : i32, i32
  }
  func.func @transform_1(%arg0: i32, %arg1: i32) -> (i32, i32) {
    %c0_i32 = arith.constant 0 : i32
    %c0_i32_0 = arith.constant 0 : i32
    return %c0_i32, %arg1 : i32, i32
  }
  func.func @transform_2(%arg0: i32, %arg1: i32) -> (i32, i32) {
    %c0_i32 = arith.constant 0 : i32
    return %arg0, %arg1 : i32, i32
  }
}

</mosaic_0001>

<llo_original>
// kernel: weight_norm_classifier_forward.1
$region0: #{weight_norm_classifier_forward.1}
  #allocation0 [shape = 'u32[]', space=smem, size = 0x4, offset = 0x4, fixed_abs, tag = 'smem constant byte address 0x4 - core index']
  #allocation1 [shape = 'u32[144,128]{1,0:T(1,128)}', space=vmem, size = 0x12000, scoped, tag = 'internal scratch']
  %s0 = inlined_call_operand.vmem [shape: f32[8,32], index: 0, kind: input, shape index: {}]
  %s1 = inlined_call_operand.vmem [shape: f32[32,256], index: 1, kind: input, shape index: {}]
  %s2 = inlined_call_operand.vmem [shape: f32[8,256], index: 2, kind: output, shape index: {}]
  %s3 = sld [smem:[#allocation0]]
  $region18: #{weight_norm_classifier_forward.1} parent=0
    _
  %s5 = ssub.s32 1, %s3
  %s6 = scalar_select 0, %s5, %s3
  // Predicated region
  $region2: #{weight_norm_classifier_forward.1} parent=0 // pred_check
    _
  $region3: #{weight_norm_classifier_forward.1} parent=0 // pred_check_branch
    %8 = sbr.rel (0) target = $region5
  $region4: #{weight_norm_classifier_forward.1} parent=0 // pred_region
    _
  $region5: #{weight_norm_classifier_forward.1} parent=0 // pred_fallthru
    _
  // Predicated region
  $region6: #{weight_norm_classifier_forward.1} parent=0 // pred_check
    _
  $region7: #{weight_norm_classifier_forward.1} parent=0 // pred_check_branch
    %10 = sbr.rel (0) target = $region9
  $region8: #{weight_norm_classifier_forward.1} parent=0 // pred_region
    _
  $region9: #{weight_norm_classifier_forward.1} parent=0 // pred_fallthru
    _
  %v11 = vld [vmem:[%s0] sm:$0xff]
  %v12 = vld [vmem:[%s1] sm:$0xff]
  %v13 = vld [vmem:[%s1 + $0x8] sm:$0xff]
  %v14 = vld [vmem:[%s1 + $0x10] sm:$0xff]
  %v15 = vld [vmem:[%s1 + $0x18] sm:$0xff]
  %v16 = vld [vmem:[%s1 + $0x20] sm:$0xff]
  %v17 = vld [vmem:[%s1 + $0x28] sm:$0xff]
  %v18 = vld [vmem:[%s1 + $0x30] sm:$0xff]
  %v19 = vld [vmem:[%s1 + $0x38] sm:$0xff]
  %vm20 = vcmask 261120
  %v22 = vsel %vm20, %v11, 0
  %24 = vmatprep.subr.mxu0 0.0
  %25 = vmatpush1.msra.mxu0 0.0
  %26 = vmatprep.subr.mxu0 0.0
  %27 = vmatpush1.msra.mxu0 0.0
  %28 = vmatprep.subr.mxu0 0.0
  %29 = vmatpush1.msra.mxu0 0.0
  %30 = vmatprep.subr.mxu0 0.0
  %31 = vmatpush1.msra.mxu0 0.0
  %32 = vmatprep.subr.mxu0 0.0
  %33 = vmatpush1.msra.mxu0 0.0
  %34 = vmatprep.subr.mxu0 0.0
  %35 = vmatpush1.msra.mxu0 0.0
  %36 = vmatprep.subr.mxu0 0.0
  %37 = vmatpush1.msra.mxu0 0.0
  %38 = vmatprep.subr.mxu0 0.0
  %39 = vmatpush1.msra.mxu0 0.0
  %40 = vmatprep.subr.mxu0 0.0
  %41 = vmatpush1.msra.mxu0 0.0
  %42 = vmatprep.subr.mxu0 0.0
  %43 = vmatpush1.msra.mxu0 0.0
  %44 = vmatprep.subr.mxu0 0.0
  %45 = vmatpush1.msra.mxu0 0.0
  %46 = vmatprep.subr.mxu0 0.0
  %47 = vmatpush1.msra.mxu0 0.0
  %48 = vmatprep.subr.mxu0 %v19
  %49 = vmatpush1.msra.mxu0 %v18
  %50 = vmatprep.subr.mxu0 %v17
  %51 = vmatpush1.msra.mxu0 %v16
  %52 = vmatprep.subr.mxu0 %v15
  %53 = vmatpush1.msra.mxu0 %v14
  %54 = vmatprep.subr.mxu0 %v13
  %55 = vmatpush1.msra.mxu0 %v12
  %56 = vmatprep.subr.mxu0 0.0
  %57 = vmatpush2.msra.mxu0 0.0
  %58 = vmatprep.subr.mxu0 0.0
  %59 = vmatpush2.msra.mxu0 0.0
  %60 = vmatprep.subr.mxu0 0.0
  %61 = vmatpush2.msra.mxu0 0.0
  %62 = vmatprep.subr.mxu0 0.0
  %63 = vmatpush2.msra.mxu0 0.0
  %64 = vmatprep.subr.mxu0 0.0
  %65 = vmatpush2.msra.mxu0 0.0
  %66 = vmatprep.subr.mxu0 0.0
  %67 = vmatpush2.msra.mxu0 0.0
  %68 = vmatprep.subr.mxu0 0.0
  %69 = vmatpush2.msra.mxu0 0.0
  %70 = vmatprep.subr.mxu0 0.0
  %71 = vmatpush2.msra.mxu0 0.0
  %72 = vmatprep.subr.mxu0 0.0
  %73 = vmatpush2.msra.mxu0 0.0
  %74 = vmatprep.subr.mxu0 0.0
  %75 = vmatpush2.msra.mxu0 0.0
  %76 = vmatprep.subr.mxu0 0.0
  %77 = vmatpush2.msra.mxu0 0.0
  %78 = vmatprep.subr.mxu0 0.0
  %79 = vmatpush2.msra.mxu0 0.0
  %80 = vmatprep.subr.mxu0 0.0
  %81 = vmatpush2.msra.mxu0 0.0
  %82 = vmatprep.subr.mxu0 0.0
  %83 = vmatpush2.msra.mxu0 0.0
  %84 = vmatprep.subr.mxu0 0.0
  %85 = vmatpush2.msra.mxu0 0.0
  %86 = vmatprep.subr.mxu0 0.0
  %87 = vmatpush2.msra.mxu0 0.0
  %88 = vmatprep.mubr.f32.mxu0 0.0
  %89 = vmatmul.mubr.f32.gmra.mxu0 %v22
  %v90 = vpop.f32.mrf.mxu0
  %v91 = vadd.f32 0.0, %v90
  %v92 = vpop.f32.mrf.mxu0
  %v93 = vadd.f32 0.0, %v92
  %94 = vdwg.mxu0
  %95 = vst [vmem:[%s2] sm:$0xff] %v91
  %96 = vst [vmem:[%s2 + $0x8] sm:$0xff] %v93
  // Predicated region
  $region10: #{weight_norm_classifier_forward.1} parent=0 // pred_check
    _
  $region11: #{weight_norm_classifier_forward.1} parent=0 // pred_check_branch
    %98 = sbr.rel (0) target = $region13
  $region12: #{weight_norm_classifier_forward.1} parent=0 // pred_region
    _
  $region13: #{weight_norm_classifier_forward.1} parent=0 // pred_fallthru
    _
  // Predicated region
  $region14: #{weight_norm_classifier_forward.1} parent=0 // pred_check
    _
  $region15: #{weight_norm_classifier_forward.1} parent=0 // pred_check_branch
    %100 = sbr.rel (0) target = $region17
  $region16: #{weight_norm_classifier_forward.1} parent=0 // pred_region
    _
  $region17: #{weight_norm_classifier_forward.1} parent=0 // pred_fallthru
    _

</llo_original>
